<compile_context>
chip_gen: v7x
topology: tpu7x:2x2x1
jax: 0.10.0
libtpu: 0.0.40
codegen_flags: <defaults>
</compile_context>

<pallas_src>
import functools

import jax
import jax.numpy as jnp
import numpy as np
from jax.experimental import pallas as pl
from jax.experimental.pallas import tpu as pltpu


# ----------------------------------------------------------------------------
# helpers
# ----------------------------------------------------------------------------

def _round_up(x, m):
    return (x + m - 1) // m * m


def _pad2(x, rows, cols):
    r, c = x.shape
    if r == rows and c == cols:
        return x
    return jnp.pad(x, ((0, rows - r), (0, cols - c)))


_LOSS_VMEM_LIMIT = 32 << 20    # conservative: fits v7x's smaller VMEM as well
_SCORE_VMEM_LIMIT = 64 << 20


# ----------------------------------------------------------------------------
# Pallas kernels
# ----------------------------------------------------------------------------

def _score_kernel(u_ref, icf_ref, o_ref):
    """cf_score tile = user_embed_tile @ item_cf_embed^T tile.

    Operands arrive as bf16; the item side is already (D, TN) so the
    contraction is a plain NN matmul on the MXU (f32 accumulation).
    """
    o_ref[...] = jnp.dot(u_ref[...], icf_ref[...],
                         preferred_element_type=jnp.float32)


def _cf_loss_kernel(u_ref, pos_ref, neg_ref, o_ref, acc_ref,
                    *, tb, batch_size, inv_b, l2_lambda):
    """BPR-style CF loss + L2 regularizer, tiled over the batch axis."""
    @pl.when(pl.program_id(0) == 0)
    def _():
        acc_ref[...] = jnp.zeros_like(acc_ref)

    u = u_ref[...]
    pos_cf = pos_ref[...]          # item_embed * entity_embed (fused in glue)
    neg_cf = neg_ref[...]

    # row-validity mask built in-kernel (padded rows at the tail are zeros)
    row = pl.program_id(0) * tb + jax.lax.broadcasted_iota(jnp.int32, (tb, 1), 0)
    mask = (row < batch_size).astype(jnp.float32)

    pos_score = jnp.sum(u * pos_cf, axis=1, keepdims=True)   # (TB, 1)
    neg_score = jnp.sum(u * neg_cf, axis=1, keepdims=True)
    diff = pos_score - neg_score
    # sigmoid via EUP exp + EUP approximate reciprocal (keeps VALU free)
    sig = pl.reciprocal(1.0 + jnp.exp(-diff), approx=True)
    cf_part = jnp.sum(-jnp.log(1e-10 + sig) * mask, axis=0, keepdims=True)

    def l2_sum(x):                                            # padded rows are zero
        return jnp.sum(jnp.sum(x * x, axis=1, keepdims=True) * 0.5,
                       axis=0, keepdims=True)

    l2_part = l2_sum(u) + l2_sum(pos_cf) + l2_sum(neg_cf)
    acc_ref[...] += cf_part + l2_lambda * l2_part

    @pl.when(pl.program_id(0) == pl.num_programs(0) - 1)
    def _():
        o_ref[...] = acc_ref[...] * inv_b


def _kg_loss_kernel(h_ref, r_ref, pt_ref, nt_ref, o_ref, acc_ref,
                    *, tb, batch_size, inv_b, l2_lambda):
    """TransE KG loss + L2 regularizer, tiled over the batch axis."""
    @pl.when(pl.program_id(0) == 0)
    def _():
        acc_ref[...] = jnp.zeros_like(acc_ref)

    def normalize(x):  # F.normalize(x, p=2, dim=1); rsqrt -> EUP, no VALU divide
        ssq = jnp.sum(x * x, axis=1, keepdims=True)
        return x * jax.lax.rsqrt(jnp.maximum(ssq, 1e-24))

    h = normalize(h_ref[...])
    r = normalize(r_ref[...])
    pt = normalize(pt_ref[...])
    nt = normalize(nt_ref[...])

    row = pl.program_id(0) * tb + jax.lax.broadcasted_iota(jnp.int32, (tb, 1), 0)
    mask = (row < batch_size).astype(jnp.float32)

    pos_score = jnp.sum((h + r - pt) ** 2, axis=1, keepdims=True)  # ||.||_2^2
    neg_score = jnp.sum((h + r - nt) ** 2, axis=1, keepdims=True)
    x = neg_score - pos_score
    # numerically stable logsigmoid(x) = min(x, 0) - log1p(exp(-|x|))
    logsig = jnp.minimum(x, 0.0) - jnp.log1p(jnp.exp(-jnp.abs(x)))
    kg_part = jnp.sum(-logsig * mask, axis=0, keepdims=True)

    def l2_sum(v):                                            # padded rows are zero
        return jnp.sum(jnp.sum(v * v, axis=1, keepdims=True) * 0.5,
                       axis=0, keepdims=True)

    l2_part = l2_sum(h) + l2_sum(r) + l2_sum(pt) + l2_sum(nt)
    acc_ref[...] += kg_part + l2_lambda * l2_part

    @pl.when(pl.program_id(0) == pl.num_programs(0) - 1)
    def _():
        o_ref[...] = acc_ref[...] * inv_b


# ----------------------------------------------------------------------------
# pallas_call wrappers
# ----------------------------------------------------------------------------

def _tiled_loss_call(kernel, embeds, batch_size, *, tb_max=512, **kernel_kwargs):
    """Run a batch-tiled scalar-loss kernel. `embeds` are (B, D) f32 arrays."""
    B, D = embeds[0].shape
    TB = min(tb_max, _round_up(B, 8))
    Bp = _round_up(B, TB)
    padded = [_pad2(e, Bp, D) for e in embeds]     # D kept at full extent (no lane pad)
    kfn = functools.partial(kernel, tb=TB, batch_size=batch_size, **kernel_kwargs)

    out = pl.pallas_call(
        kfn,
        out_shape=jax.ShapeDtypeStruct((1, 1), jnp.float32),
        grid=(Bp // TB,),
        in_specs=[pl.BlockSpec((TB, D), lambda i: (i, 0)) for _ in padded],
        out_specs=pl.BlockSpec((1, 1), lambda i: (0, 0)),
        scratch_shapes=[pltpu.VMEM((1, 1), jnp.float32)],
        compiler_params=pltpu.CompilerParams(
            dimension_semantics=("arbitrary",),            # reduction axis
            vmem_limit_bytes=_LOSS_VMEM_LIMIT),
    )(*padded)
    return out[0, 0]


# ----------------------------------------------------------------------------
# Module (parameters initialized deterministically with xavier_uniform)
# ----------------------------------------------------------------------------

def _xavier_uniform(key, shape):
    fan_out, fan_in = shape[0], shape[1]
    rf = int(np.prod(shape[2:])) if len(shape) > 2 else 1
    bound = float(np.sqrt(6.0 / ((fan_in + fan_out) * rf)))
    return jax.random.uniform(key, shape, jnp.float32, -bound, bound)


class EmbeddingBased:
    def __init__(self, n_users, n_items, n_entities, n_relations,
                 embed_dim, relation_dim,
                 cf_l2loss_lambda=1e-5, kg_l2loss_lambda=1e-5, seed=0):
        self.n_users, self.n_items = n_users, n_items
        self.n_entities, self.n_relations = n_entities, n_relations
        self.embed_dim, self.relation_dim = embed_dim, relation_dim
        self.cf_l2loss_lambda = cf_l2loss_lambda
        self.kg_l2loss_lambda = kg_l2loss_lambda
        self.KG_embedding_type = 'TransE'

        ks = jax.random.split(jax.random.PRNGKey(seed), 5)
        self.user_embed = _xavier_uniform(ks[0], (n_users, embed_dim))
        self.item_embed = _xavier_uniform(ks[1], (n_items, embed_dim))
        self.entity_embed = _xavier_uniform(ks[2], (n_entities, embed_dim))
        self.relation_embed = _xavier_uniform(ks[3], (n_relations, relation_dim))
        # trans_M only feeds the TransR path (not implemented here); kept for
        # shape fidelity with the PyTorch module.
        self.trans_M = _xavier_uniform(ks[4], (n_relations, embed_dim, relation_dim))

    # ------------------------------------------------------------------
    def calc_cf_loss(self, user_ids, item_pos_ids, item_neg_ids, *, tb_max=512):
        u = self.user_embed[user_ids]
        # fuse item*entity products in glue: kernel streams 3 arrays, not 5
        pos_cf = self.item_embed[item_pos_ids] * self.entity_embed[item_pos_ids]
        neg_cf = self.item_embed[item_neg_ids] * self.entity_embed[item_neg_ids]
        b = int(u.shape[0])
        return _tiled_loss_call(_cf_loss_kernel, (u, pos_cf, neg_cf), b,
                                tb_max=tb_max, inv_b=1.0 / b,
                                l2_lambda=self.cf_l2loss_lambda)

    def calc_kg_loss_TransE(self, h, r, pos_t, neg_t, *, tb_max=512):
        r_e = self.relation_embed[r]
        h_e = self.entity_embed[h]
        pt_e = self.entity_embed[pos_t]
        nt_e = self.entity_embed[neg_t]
        b = int(h_e.shape[0])
        return _tiled_loss_call(_kg_loss_kernel, (h_e, r_e, pt_e, nt_e), b,
                                tb_max=tb_max, inv_b=1.0 / b,
                                l2_lambda=self.kg_l2loss_lambda)

    # TODO(synk): calc_kg_loss_TransR is referenced but not defined in the
    # source module; only the TransE path is implemented.

    def calc_loss(self, user_ids, item_pos_ids, item_neg_ids, h, r, pos_t, neg_t):
        kg_loss = self.calc_kg_loss_TransE(h, r, pos_t, neg_t)
        cf_loss = self.calc_cf_loss(user_ids, item_pos_ids, item_neg_ids)
        return kg_loss + cf_loss

    def calc_score(self, user_ids, item_ids):
        u = self.user_embed[user_ids]                                   # (U, D)
        # gather + elementwise product + transpose fused in XLA glue; one bf16
        # (D, I) operand streamed into the kernel instead of two f32 ones.
        icf_t = (self.item_embed[item_ids] * self.entity_embed[item_ids]).T  # (D, I)

        U, D = u.shape
        I = icf_t.shape[1]
        # Tile sizes fit comfortably in v7x's 64 MiB VMEM with double-buffering
        # while staying 128-aligned lane-dense for the output.
        TM = min(256, _round_up(U, 16))      # 16-row multiple for bf16 packing
        TN = min(512, _round_up(I, 128))
        Up, Ip = _round_up(U, TM), _round_up(I, TN)

        u_p = _pad2(u, Up, D).astype(jnp.bfloat16)
        icf_p = _pad2(icf_t, D, Ip).astype(jnp.bfloat16)

        out = pl.pallas_call(
            _score_kernel,
            out_shape=jax.ShapeDtypeStruct((Up, Ip), jnp.float32),
            grid=(Up // TM, Ip // TN),
            in_specs=[pl.BlockSpec((TM, D), lambda i, j: (i, 0)),
                      pl.BlockSpec((D, TN), lambda i, j: (0, j))],
            out_specs=pl.BlockSpec((TM, TN), lambda i, j: (i, j)),
            compiler_params=pltpu.CompilerParams(
                dimension_semantics=("parallel", "parallel"),
                vmem_limit_bytes=_SCORE_VMEM_LIMIT),
        )(u_p, icf_p)
        return out[:U, :I]

    def forward(self, *inputs, is_train, mode=None):
        if is_train:
            if mode == 'CF':
                return self.calc_cf_loss(*inputs)
            elif mode == 'KG':
                return self.calc_kg_loss_TransE(*inputs)
            return self.calc_loss(*inputs)
        else:
            return self.calc_score(*inputs)


# ----------------------------------------------------------------------------
# Pure-JAX references (for correctness check)
# ----------------------------------------------------------------------------

def _ref_cf_loss(m, uid, pid, nid):
    u = m.user_embed[uid]
    pcf = m.item_embed[pid] * m.entity_embed[pid]
    ncf = m.item_embed[nid] * m.entity_embed[nid]
    ps = jnp.sum(u * pcf, axis=1)
    ns = jnp.sum(u * ncf, axis=1)
    cf = jnp.mean(-jnp.log(1e-10 + jax.nn.sigmoid(ps - ns)))
    l2 = sum(jnp.mean(jnp.sum(x * x, axis=1) / 2.0) for x in (u, pcf, ncf))
    return cf + m.cf_l2loss_lambda * l2


def _ref_kg_loss(m, h, r, pt, nt):
    def norm(x):
        return x / jnp.maximum(jnp.linalg.norm(x, axis=1, keepdims=True), 1e-12)
    he, re = norm(m.entity_embed[h]), norm(m.relation_embed[r])
    pe, ne = norm(m.entity_embed[pt]), norm(m.entity_embed[nt])
    ps = jnp.sum((he + re - pe) ** 2, axis=1)
    ns = jnp.sum((he + re - ne) ** 2, axis=1)
    kg = jnp.mean(-jax.nn.log_sigmoid(ns - ps))
    l2 = sum(jnp.mean(jnp.sum(x * x, axis=1) / 2.0) for x in (he, re, pe, ne))
    return kg + m.kg_l2loss_lambda * l2


def _ref_score(m, uid, iid):
    u = m.user_embed[uid]
    icf = m.item_embed[iid] * m.entity_embed[iid]
    # reference mirrors the kernel's bf16-operand / f32-accumulate matmul
    return jnp.dot(u.astype(jnp.bfloat16), icf.astype(jnp.bfloat16).T,
                   preferred_element_type=jnp.float32)


# ----------------------------------------------------------------------------

if __name__ == "__main__":
    n_users, n_items, n_entities, n_relations = 8, 16, 16, 4
    embed_dim = relation_dim = 32          # TransE requires relation_dim == embed_dim
    cf_batch = kg_batch = 20               # not a multiple of 8 -> exercises masking

    model = EmbeddingBased(n_users, n_items, n_entities, n_relations,
                           embed_dim, relation_dim,
                           cf_l2loss_lambda=1e-4, kg_l2loss_lambda=1e-4, seed=0)

    key = jax.random.PRNGKey(0)
    ks = jax.random.split(key, 7)
    user_ids = jax.random.randint(ks[0], (cf_batch,), 0, n_users)
    item_pos = jax.random.randint(ks[1], (cf_batch,), 0, n_items)
    item_neg = jax.random.randint(ks[2], (cf_batch,), 0, n_items)
    h = jax.random.randint(ks[3], (kg_batch,), 0, n_entities)
    r = jax.random.randint(ks[4], (kg_batch,), 0, n_relations)
    pos_t = jax.random.randint(ks[5], (kg_batch,), 0, n_entities)
    neg_t = jax.random.randint(ks[6], (kg_batch,), 0, n_entities)

    # training forward (combined loss, CF-only, KG-only) and inference forward
    total_loss = model.forward(user_ids, item_pos, item_neg, h, r, pos_t, neg_t,
                               is_train=True)
    cf_loss = model.forward(user_ids, item_pos, item_neg, is_train=True, mode='CF')
    kg_loss = model.forward(h, r, pos_t, neg_t, is_train=True, mode='KG')
    score = model.forward(jnp.arange(n_users), jnp.arange(n_items), is_train=False)

    # multi-tile path (3 grid steps + padded rows): exercises the pl.when
    # init/finalize accumulator across the batch grid
    cf_loss_mt = model.calc_cf_loss(user_ids, item_pos, item_neg, tb_max=8)
    kg_loss_mt = model.calc_kg_loss_TransE(h, r, pos_t, neg_t, tb_max=8)

    jax.block_until_ready((total_loss, cf_loss, kg_loss, score,
                           cf_loss_mt, kg_loss_mt))

    # correctness checks against pure-JAX references
    ref_cf = _ref_cf_loss(model, user_ids, item_pos, item_neg)
    ref_kg = _ref_kg_loss(model, h, r, pos_t, neg_t)
    np.testing.assert_allclose(np.asarray(cf_loss), np.asarray(ref_cf),
                               rtol=5e-3, atol=1e-5)
    np.testing.assert_allclose(np.asarray(kg_loss), np.asarray(ref_kg),
                               rtol=1e-3, atol=1e-5)
    np.testing.assert_allclose(np.asarray(cf_loss_mt), np.asarray(ref_cf),
                               rtol=5e-3, atol=1e-5)
    np.testing.assert_allclose(np.asarray(kg_loss_mt), np.asarray(ref_kg),
                               rtol=1e-3, atol=1e-5)
    np.testing.assert_allclose(np.asarray(total_loss),
                               np.asarray(cf_loss + kg_loss), rtol=1e-5, atol=1e-6)
    np.testing.assert_allclose(np.asarray(score),
                               np.asarray(_ref_score(model, jnp.arange(n_users),
                                                     jnp.arange(n_items))),
                               rtol=1e-2, atol=1e-4)

    print("KERNEL_OK")
</pallas_src>

<mosaic_0001>
module attributes {stable_mosaic.version = 11 : i64} {
  func.func @_kg_loss_kernel(%arg0: i32, %arg1: memref<24x32xf32, #tpu.memory_space<vmem>>, %arg2: memref<24x32xf32, #tpu.memory_space<vmem>>, %arg3: memref<24x32xf32, #tpu.memory_space<vmem>>, %arg4: memref<24x32xf32, #tpu.memory_space<vmem>>, %arg5: memref<1x1xf32, #tpu.memory_space<vmem>>, %arg6: memref<1x1xf32, #tpu.memory_space<vmem>>) attributes {dimension_semantics = [#tpu.dimension_semantics<arbitrary>], iteration_bounds = array<i64: 1>, scalar_prefetch = 0 : i64, scratch_operands = 1 : i64, tpu.core_type = #tpu.core_type<tc>, window_params = [{transform_indices = @transform_0, window_bounds = array<i64: 24, 32>}, {transform_indices = @transform_1, window_bounds = array<i64: 24, 32>}, {transform_indices = @transform_2, window_bounds = array<i64: 24, 32>}, {transform_indices = @transform_3, window_bounds = array<i64: 24, 32>}, {pipeline_mode = #tpu.pipeline_mode<synchronous>, transform_indices = @transform_4, window_bounds = array<i64: 1, 1>}]} {
    %c0_i32 = arith.constant 0 : i32
    %0 = arith.cmpi eq, %arg0, %c0_i32 : i32
    %1 = arith.extui %0 : i1 to i32
    %c0_i32_0 = arith.constant 0 : i32
    %2 = arith.cmpi ne, %1, %c0_i32_0 : i32
    scf.if %2 {
      %cst_40 = arith.constant 0.000000e+00 : f32
      %111 = vector.broadcast %cst_40 : f32 to vector<1x1xf32>
      %c0_41 = arith.constant 0 : index
      %c0_42 = arith.constant 0 : index
      %112 = vector.load %arg6[%c0_41, %c0_42] : memref<1x1xf32, #tpu.memory_space<vmem>>, vector<1x1xf32>
      tpu.vector_store %arg6[%c0_41, %c0_42], %111 {strides = array<i32>} : memref<1x1xf32, #tpu.memory_space<vmem>>, vector<1x1xf32>,
    } else {
    }
    %c0 = arith.constant 0 : index
    %c0_1 = arith.constant 0 : index
    %3 = vector.load %arg1[%c0, %c0_1] : memref<24x32xf32, #tpu.memory_space<vmem>>, vector<24x32xf32>
    %4 = arith.mulf %3, %3 : vector<24x32xf32>
    %cst = arith.constant dense<0.000000e+00> : vector<24xf32>
    %5 = vector.multi_reduction <add>, %4, %cst [1] : vector<24x32xf32> to vector<24xf32>
    %6 = vector.shape_cast %5 : vector<24xf32> to vector<24x1xf32>
    %cst_2 = arith.constant 1.000000e-24 : f32
    %7 = vector.broadcast %cst_2 : f32 to vector<24x1xf32>
    %8 = arith.maximumf %6, %7 : vector<24x1xf32>
    %9 = math.rsqrt %8 : vector<24x1xf32>
    %10 = vector.broadcast %9 : vector<24x1xf32> to vector<24x32xf32>
    %11 = arith.mulf %3, %10 : vector<24x32xf32>
    %c0_3 = arith.constant 0 : index
    %c0_4 = arith.constant 0 : index
    %12 = vector.load %arg2[%c0_3, %c0_4] : memref<24x32xf32, #tpu.memory_space<vmem>>, vector<24x32xf32>
    %13 = arith.mulf %12, %12 : vector<24x32xf32>
    %cst_5 = arith.constant dense<0.000000e+00> : vector<24xf32>
    %14 = vector.multi_reduction <add>, %13, %cst_5 [1] : vector<24x32xf32> to vector<24xf32>
    %15 = vector.shape_cast %14 : vector<24xf32> to vector<24x1xf32>
    %cst_6 = arith.constant 1.000000e-24 : f32
    %16 = vector.broadcast %cst_6 : f32 to vector<24x1xf32>
    %17 = arith.maximumf %15, %16 : vector<24x1xf32>
    %18 = math.rsqrt %17 : vector<24x1xf32>
    %19 = vector.broadcast %18 : vector<24x1xf32> to vector<24x32xf32>
    %20 = arith.mulf %12, %19 : vector<24x32xf32>
    %c0_7 = arith.constant 0 : index
    %c0_8 = arith.constant 0 : index
    %21 = vector.load %arg3[%c0_7, %c0_8] : memref<24x32xf32, #tpu.memory_space<vmem>>, vector<24x32xf32>
    %22 = arith.mulf %21, %21 : vector<24x32xf32>
    %cst_9 = arith.constant dense<0.000000e+00> : vector<24xf32>
    %23 = vector.multi_reduction <add>, %22, %cst_9 [1] : vector<24x32xf32> to vector<24xf32>
    %24 = vector.shape_cast %23 : vector<24xf32> to vector<24x1xf32>
    %cst_10 = arith.constant 1.000000e-24 : f32
    %25 = vector.broadcast %cst_10 : f32 to vector<24x1xf32>
    %26 = arith.maximumf %24, %25 : vector<24x1xf32>
    %27 = math.rsqrt %26 : vector<24x1xf32>
    %28 = vector.broadcast %27 : vector<24x1xf32> to vector<24x32xf32>
    %29 = arith.mulf %21, %28 : vector<24x32xf32>
    %c0_11 = arith.constant 0 : index
    %c0_12 = arith.constant 0 : index
    %30 = vector.load %arg4[%c0_11, %c0_12] : memref<24x32xf32, #tpu.memory_space<vmem>>, vector<24x32xf32>
    %31 = arith.mulf %30, %30 : vector<24x32xf32>
    %cst_13 = arith.constant dense<0.000000e+00> : vector<24xf32>
    %32 = vector.multi_reduction <add>, %31, %cst_13 [1] : vector<24x32xf32> to vector<24xf32>
    %33 = vector.shape_cast %32 : vector<24xf32> to vector<24x1xf32>
    %cst_14 = arith.constant 1.000000e-24 : f32
    %34 = vector.broadcast %cst_14 : f32 to vector<24x1xf32>
    %35 = arith.maximumf %33, %34 : vector<24x1xf32>
    %36 = math.rsqrt %35 : vector<24x1xf32>
    %37 = vector.broadcast %36 : vector<24x1xf32> to vector<24x32xf32>
    %38 = arith.mulf %30, %37 : vector<24x32xf32>
    %c24_i32 = arith.constant 24 : i32
    %39 = arith.muli %arg0, %c24_i32 : i32
    %40 = tpu.iota {dimensions = array<i32: 0>} : vector<24x1xi32>
    %41 = vector.broadcast %39 : i32 to vector<24x1xi32>
    %42 = arith.addi %41, %40 : vector<24x1xi32>
    %c20_i32 = arith.constant 20 : i32
    %43 = vector.broadcast %c20_i32 : i32 to vector<24x1xi32>
    %44 = arith.cmpi slt, %42, %43 : vector<24x1xi32>
    %45 = arith.extui %44 : vector<24x1xi1> to vector<24x1xi32>
    %46 = arith.sitofp %45 : vector<24x1xi32> to vector<24x1xf32>
    %47 = arith.addf %11, %20 : vector<24x32xf32>
    %48 = arith.subf %47, %29 : vector<24x32xf32>
    %49 = arith.mulf %48, %48 : vector<24x32xf32>
    %cst_15 = arith.constant dense<0.000000e+00> : vector<24xf32>
    %50 = vector.multi_reduction <add>, %49, %cst_15 [1] : vector<24x32xf32> to vector<24xf32>
    %51 = vector.shape_cast %50 : vector<24xf32> to vector<24x1xf32>
    %52 = arith.addf %11, %20 : vector<24x32xf32>
    %53 = arith.subf %52, %38 : vector<24x32xf32>
    %54 = arith.mulf %53, %53 : vector<24x32xf32>
    %cst_16 = arith.constant dense<0.000000e+00> : vector<24xf32>
    %55 = vector.multi_reduction <add>, %54, %cst_16 [1] : vector<24x32xf32> to vector<24xf32>
    %56 = vector.shape_cast %55 : vector<24xf32> to vector<24x1xf32>
    %57 = arith.subf %56, %51 : vector<24x1xf32>
    %cst_17 = arith.constant 0.000000e+00 : f32
    %58 = vector.broadcast %cst_17 : f32 to vector<24x1xf32>
    %59 = arith.minimumf %57, %58 : vector<24x1xf32>
    %60 = math.absf %57 : vector<24x1xf32>
    %cst_18 = arith.constant 0.000000e+00 : f32
    %61 = vector.broadcast %cst_18 : f32 to vector<24x1xf32>
    %62 = arith.subf %61, %60 : vector<24x1xf32>
    %63 = math.exp %62 : vector<24x1xf32>
    %64 = math.log1p %63 : vector<24x1xf32>
    %65 = arith.subf %59, %64 : vector<24x1xf32>
    %cst_19 = arith.constant 0.000000e+00 : f32
    %66 = vector.broadcast %cst_19 : f32 to vector<24x1xf32>
    %67 = arith.subf %66, %65 : vector<24x1xf32>
    %68 = arith.mulf %67, %46 : vector<24x1xf32>
    %cst_20 = arith.constant dense<0.000000e+00> : vector<1xf32>
    %69 = vector.multi_reduction <add>, %68, %cst_20 [0] : vector<24x1xf32> to vector<1xf32>
    %70 = vector.shape_cast %69 : vector<1xf32> to vector<1x1xf32>
    %71 = arith.mulf %11, %11 : vector<24x32xf32>
    %cst_21 = arith.constant dense<0.000000e+00> : vector<24xf32>
    %72 = vector.multi_reduction <add>, %71, %cst_21 [1] : vector<24x32xf32> to vector<24xf32>
    %73 = vector.shape_cast %72 : vector<24xf32> to vector<24x1xf32>
    %cst_22 = arith.constant 5.000000e-01 : f32
    %74 = vector.broadcast %cst_22 : f32 to vector<24x1xf32>
    %75 = arith.mulf %73, %74 : vector<24x1xf32>
    %cst_23 = arith.constant dense<0.000000e+00> : vector<1xf32>
    %76 = vector.multi_reduction <add>, %75, %cst_23 [0] : vector<24x1xf32> to vector<1xf32>
    %77 = vector.shape_cast %76 : vector<1xf32> to vector<1x1xf32>
    %78 = arith.mulf %20, %20 : vector<24x32xf32>
    %cst_24 = arith.constant dense<0.000000e+00> : vector<24xf32>
    %79 = vector.multi_reduction <add>, %78, %cst_24 [1] : vector<24x32xf32> to vector<24xf32>
    %80 = vector.shape_cast %79 : vector<24xf32> to vector<24x1xf32>
    %cst_25 = arith.constant 5.000000e-01 : f32
    %81 = vector.broadcast %cst_25 : f32 to vector<24x1xf32>
    %82 = arith.mulf %80, %81 : vector<24x1xf32>
    %cst_26 = arith.constant dense<0.000000e+00> : vector<1xf32>
    %83 = vector.multi_reduction <add>, %82, %cst_26 [0] : vector<24x1xf32> to vector<1xf32>
    %84 = vector.shape_cast %83 : vector<1xf32> to vector<1x1xf32>
    %85 = arith.addf %77, %84 : vector<1x1xf32>
    %86 = arith.mulf %29, %29 : vector<24x32xf32>
    %cst_27 = arith.constant dense<0.000000e+00> : vector<24xf32>
    %87 = vector.multi_reduction <add>, %86, %cst_27 [1] : vector<24x32xf32> to vector<24xf32>
    %88 = vector.shape_cast %87 : vector<24xf32> to vector<24x1xf32>
    %cst_28 = arith.constant 5.000000e-01 : f32
    %89 = vector.broadcast %cst_28 : f32 to vector<24x1xf32>
    %90 = arith.mulf %88, %89 : vector<24x1xf32>
    %cst_29 = arith.constant dense<0.000000e+00> : vector<1xf32>
    %91 = vector.multi_reduction <add>, %90, %cst_29 [0] : vector<24x1xf32> to vector<1xf32>
    %92 = vector.shape_cast %91 : vector<1xf32> to vector<1x1xf32>
    %93 = arith.addf %85, %92 : vector<1x1xf32>
    %94 = arith.mulf %38, %38 : vector<24x32xf32>
    %cst_30 = arith.constant dense<0.000000e+00> : vector<24xf32>
    %95 = vector.multi_reduction <add>, %94, %cst_30 [1] : vector<24x32xf32> to vector<24xf32>
    %96 = vector.shape_cast %95 : vector<24xf32> to vector<24x1xf32>
    %cst_31 = arith.constant 5.000000e-01 : f32
    %97 = vector.broadcast %cst_31 : f32 to vector<24x1xf32>
    %98 = arith.mulf %96, %97 : vector<24x1xf32>
    %cst_32 = arith.constant dense<0.000000e+00> : vector<1xf32>
    %99 = vector.multi_reduction <add>, %98, %cst_32 [0] : vector<24x1xf32> to vector<1xf32>
    %100 = vector.shape_cast %99 : vector<1xf32> to vector<1x1xf32>
    %101 = arith.addf %93, %100 : vector<1x1xf32>
    %c0_33 = arith.constant 0 : index
    %c0_34 = arith.constant 0 : index
    %102 = vector.load %arg6[%c0_33, %c0_34] : memref<1x1xf32, #tpu.memory_space<vmem>>, vector<1x1xf32>
    %cst_35 = arith.constant 9.99999974E-5 : f32
    %103 = vector.broadcast %cst_35 : f32 to vector<1x1xf32>
    %104 = arith.mulf %103, %101 : vector<1x1xf32>
    %105 = arith.addf %70, %104 : vector<1x1xf32>
    %106 = arith.addf %102, %105 : vector<1x1xf32>
    %c0_36 = arith.constant 0 : index
    %c0_37 = arith.constant 0 : index
    %107 = vector.load %arg6[%c0_36, %c0_37] : memref<1x1xf32, #tpu.memory_space<vmem>>, vector<1x1xf32>
    tpu.vector_store %arg6[%c0_36, %c0_37], %106 {strides = array<i32>} : memref<1x1xf32, #tpu.memory_space<vmem>>, vector<1x1xf32>,
    %c0_i32_38 = arith.constant 0 : i32
    %108 = arith.cmpi eq, %arg0, %c0_i32_38 : i32
    %109 = arith.extui %108 : i1 to i32
    %c0_i32_39 = arith.constant 0 : i32
    %110 = arith.cmpi ne, %109, %c0_i32_39 : i32
    scf.if %110 {
      %c0_40 = arith.constant 0 : index
      %c0_41 = arith.constant 0 : index
      %111 = vector.load %arg6[%c0_40, %c0_41] : memref<1x1xf32, #tpu.memory_space<vmem>>, vector<1x1xf32>
      %cst_42 = arith.constant 5.000000e-02 : f32
      %112 = vector.broadcast %cst_42 : f32 to vector<1x1xf32>
      %113 = arith.mulf %111, %112 : vector<1x1xf32>
      %c0_43 = arith.constant 0 : index
      %c0_44 = arith.constant 0 : index
      %114 = vector.load %arg5[%c0_43, %c0_44] : memref<1x1xf32, #tpu.memory_space<vmem>>, vector<1x1xf32>
      tpu.vector_store %arg5[%c0_43, %c0_44], %113 {strides = array<i32>} : memref<1x1xf32, #tpu.memory_space<vmem>>, vector<1x1xf32>,
    } else {
    }
    return
  }
  func.func @transform_0(%arg0: i32) -> (i32, i32) {
    %c0_i32 = arith.constant 0 : i32
    %c0_i32_0 = arith.constant 0 : i32
    return %arg0, %c0_i32 : i32, i32
  }
  func.func @transform_1(%arg0: i32) -> (i32, i32) {
    %c0_i32 = arith.constant 0 : i32
    %c0_i32_0 = arith.constant 0 : i32
    return %arg0, %c0_i32 : i32, i32
  }
  func.func @transform_2(%arg0: i32) -> (i32, i32) {
    %c0_i32 = arith.constant 0 : i32
    %c0_i32_0 = arith.constant 0 : i32
    return %arg0, %c0_i32 : i32, i32
  }
  func.func @transform_3(%arg0: i32) -> (i32, i32) {
    %c0_i32 = arith.constant 0 : i32
    %c0_i32_0 = arith.constant 0 : i32
    return %arg0, %c0_i32 : i32, i32
  }
  func.func @transform_4(%arg0: i32) -> (i32, i32) {
    %c0_i32 = arith.constant 0 : i32
    %c0_i32_0 = arith.constant 0 : i32
    %c0_i32_1 = arith.constant 0 : i32
    return %c0_i32, %c0_i32_0 : i32, i32
  }
}

</mosaic_0001>

<llo_original>
// kernel: tpu_custom_call.1
$region0: #{tpu_custom_call.1}
  #allocation0 [shape = 'u32[]', space=smem, size = 0x4, offset = 0x4, fixed_abs, tag = 'smem constant byte address 0x4 - core index']
  #allocation1 [shape = 'u32[144,128]{1,0:T(1,128)}', space=vmem, size = 0x12000, scoped, tag = 'internal scratch']
  #allocation2 [shape = 'f32[1,1]{1,0:T(1,128)}', space=vmem, size = 0x200, scoped, tag = 'scratch operand']
  %s0 = inlined_call_operand.hbm [shape: f32[24,32], index: 0, kind: input, shape index: {}]
  %s1 = inlined_call_operand.hbm [shape: f32[24,32], index: 1, kind: input, shape index: {}]
  %s2 = inlined_call_operand.hbm [shape: f32[24,32], index: 2, kind: input, shape index: {}]
  %s3 = inlined_call_operand.hbm [shape: f32[24,32], index: 3, kind: input, shape index: {}]
  %s4 = inlined_call_operand.hbm [shape: f32[1,1], index: 4, kind: output, shape index: {}]
  %s5 = sld [smem:[#allocation0]]
  $region50: #{tpu_custom_call.1} parent=0
    _
  %s7 = ssub.s32 1, %s5
  %s8 = scalar_select 0, %s7, %s5
  $region1: #{tpu_custom_call.1} parent=0
    #allocation3 [shape = 'u8[12288]{0}', space=vmem, size = 0x3000, scoped, tag = 'input window, operand 0, single buffered']
    #allocation4 [shape = 's32[1]{0}', space=sflag, size = 0x4, scoped, tag = 'scoped memory for tpu_custom_call.1']
    #allocation5 [shape = 's32[1]{0}', space=sflag, size = 0x4, scoped, tag = 'scoped memory for tpu_custom_call.1']
    #allocation6 [shape = 'u8[12288]{0}', space=vmem, size = 0x3000, scoped, tag = 'input window, operand 1, single buffered']
    #allocation7 [shape = 's32[1]{0}', space=sflag, size = 0x4, scoped, tag = 'scoped memory for tpu_custom_call.1']
    #allocation8 [shape = 'u8[12288]{0}', space=vmem, size = 0x3000, scoped, tag = 'input window, operand 2, single buffered']
    #allocation9 [shape = 'u8[12288]{0}', space=vmem, size = 0x3000, scoped, tag = 'input window, operand 3, single buffered']
    #allocation10 [shape = 's32[1]{0}', space=sflag, size = 0x4, scoped, tag = 'scoped memory for tpu_custom_call.1']
    #allocation11 [shape = 'u8[512]{0}', space=vmem, size = 0x400, scoped, tag = 'output window, operand 0, single buffered']
    %9 = vsyncpa [#allocation4], 0
    %10 = vsyncpa [#allocation7], 0
    %11 = vsyncpa [#allocation10], 0
    %12 = vsyncpa [#allocation5], 0
    // Predicated region
    $region2: #{tpu_custom_call.1} parent=1 // pred_check
      _
    $region3: #{tpu_custom_call.1} parent=1 // pred_check_branch
      %14 = sbr.rel (0) target = $region5
    $region4: #{tpu_custom_call.1} parent=1 // pred_region
      %s16 = ssub.s32 384, 384
      %17 = vsyncadd [#allocation4], %s16
      %s18 = sshll.u32 [#allocation3], 4
      %s19 = int_to_ptr.vmem [resolvable:$true] %s18
      %24 = dma.hbm_to_vmem [thread:$0]  %s0, 384, %s19, [#allocation4], 128, 128, 8
    $region5: #{tpu_custom_call.1} parent=1 // pred_fallthru
      _
    // Predicated region
    $region6: #{tpu_custom_call.1} parent=1 // pred_check
      _
    $region7: #{tpu_custom_call.1} parent=1 // pred_check_branch
      %26 = sbr.rel (0) target = $region9
    $region8: #{tpu_custom_call.1} parent=1 // pred_region
      %s28 = ssub.s32 384, 384
      %29 = vsyncadd [#allocation7], %s28
      %s30 = sshll.u32 [#allocation6], 4
      %s31 = int_to_ptr.vmem [resolvable:$true] %s30
      %36 = dma.hbm_to_vmem [thread:$0]  %s1, 384, %s31, [#allocation7], 128, 128, 8
    $region9: #{tpu_custom_call.1} parent=1 // pred_fallthru
      _
    // Predicated region
    $region10: #{tpu_custom_call.1} parent=1 // pred_check
      _
    $region11: #{tpu_custom_call.1} parent=1 // pred_check_branch
      %38 = sbr.rel (0) target = $region13
    $region12: #{tpu_custom_call.1} parent=1 // pred_region
      %s40 = ssub.s32 384, 384
      %41 = vsyncadd [#allocation7], %s40
      %s42 = sshll.u32 [#allocation8], 4
      %s43 = int_to_ptr.vmem [resolvable:$true] %s42
      %48 = dma.hbm_to_vmem [thread:$0]  %s2, 384, %s43, [#allocation7], 128, 128, 8
    $region13: #{tpu_custom_call.1} parent=1 // pred_fallthru
      _
    // Predicated region
    $region14: #{tpu_custom_call.1} parent=1 // pred_check
      _
    $region15: #{tpu_custom_call.1} parent=1 // pred_check_branch
      %50 = sbr.rel (0) target = $region17
    $region16: #{tpu_custom_call.1} parent=1 // pred_region
      %s52 = ssub.s32 384, 384
      %53 = vsyncadd [#allocation10], %s52
      %s54 = sshll.u32 [#allocation9], 4
      %s55 = int_to_ptr.vmem [resolvable:$true] %s54
      %60 = dma.hbm_to_vmem [thread:$0]  %s3, 384, %s55, [#allocation10], 128, 128, 8
    $region17: #{tpu_custom_call.1} parent=1 // pred_fallthru
      _
    // Predicated region
    $region18: #{tpu_custom_call.1} parent=1 // pred_check
      _
    $region19: #{tpu_custom_call.1} parent=1 // pred_check_branch
      %62 = sbr.rel (0) target = $region21
    $region20: #{tpu_custom_call.1} parent=1 // pred_region
      %63 = dma.done [#allocation4], 384
    $region21: #{tpu_custom_call.1} parent=1 // pred_fallthru
      _
    // Predicated region
    $region22: #{tpu_custom_call.1} parent=1 // pred_check
      _
    $region23: #{tpu_custom_call.1} parent=1 // pred_check_branch
      %65 = sbr.rel (0) target = $region25
    $region24: #{tpu_custom_call.1} parent=1 // pred_region
      %66 = dma.done [#allocation7], 384
    $region25: #{tpu_custom_call.1} parent=1 // pred_fallthru
      _
    // Predicated region
    $region26: #{tpu_custom_call.1} parent=1 // pred_check
      _
    $region27: #{tpu_custom_call.1} parent=1 // pred_check_branch
      %68 = sbr.rel (0) target = $region29
    $region28: #{tpu_custom_call.1} parent=1 // pred_region
      %69 = dma.done [#allocation7], 384
    $region29: #{tpu_custom_call.1} parent=1 // pred_fallthru
      _
    // Predicated region
    $region30: #{tpu_custom_call.1} parent=1 // pred_check
      _
    $region31: #{tpu_custom_call.1} parent=1 // pred_check_branch
      %71 = sbr.rel (0) target = $region33
    $region32: #{tpu_custom_call.1} parent=1 // pred_region
      %72 = dma.done [#allocation10], 384
    $region33: #{tpu_custom_call.1} parent=1 // pred_fallthru
      _
    %p73 = scmp.eq.s32.totalorder 0, 0
    // Predicated region
    $region34: #{tpu_custom_call.1} parent=1 // pred_check
      %p74 = pneg %p73
    $region35: #{tpu_custom_call.1} parent=1 // pred_check_branch
      %76 = sbr.rel (%p74) target = $region37
    $region36: #{tpu_custom_call.1} parent=1 // pred_region
      %vm77 = vcmask 0
      %78 = vst.msk [vmem:[#allocation2] sm:$0x1] %vm77, 0.0
    $region37: #{tpu_custom_call.1} parent=1 // pred_fallthru
      _
    %v79 = vld [vmem:[#allocation3] sm:$0xff]
    %v80 = vld [vmem:[#allocation3 + $0x8] sm:$0xff]
    %v81 = vld [vmem:[#allocation3 + $0x10] sm:$0xff]
    %v82 = vmul.f32 %v79, %v79
    %v83 = vmul.f32 %v80, %v80
    %v84 = vmul.f32 %v81, %v81
    %vm85 = vcmask 261120
    %v86 = vsel %vm85, %v82, 0.0
    %87 = vadd.xlane.f32.xlu0 %v86
    %v88 = vpop.xlane.xlu0 %87
    %v89 = vsel %vm85, %v83, 0.0
    %90 = vadd.xlane.f32.xlu0 %v89
    %v91 = vpop.xlane.xlu0 %90
    %v92 = vsel %vm85, %v84, 0.0
    %93 = vadd.xlane.f32.xlu0 %v92
    %v94 = vpop.xlane.xlu0 %93
    %v95 = vmax.f32 %v88, 1e-24
    %v96 = vmax.f32 %v91, 1e-24
    %v97 = vmax.f32 %v94, 1e-24
    %v98 = vrsqrt.pop %v95
    %v99 = vrsqrt.pop %v96
    %v100 = vrsqrt.pop %v97
    %v101 = vmul.f32 %v79, %v98
    %v102 = vmul.f32 %v80, %v99
    %v103 = vmul.f32 %v81, %v100
    %v104 = vld [vmem:[#allocation6] sm:$0xff]
    %v105 = vld [vmem:[#allocation6 + $0x8] sm:$0xff]
    %v106 = vld [vmem:[#allocation6 + $0x10] sm:$0xff]
    %v107 = vmul.f32 %v104, %v104
    %v108 = vmul.f32 %v105, %v105
    %v109 = vmul.f32 %v106, %v106
    %v110 = vsel %vm85, %v107, 0.0
    %111 = vadd.xlane.f32.xlu0 %v110
    %v112 = vpop.xlane.xlu0 %111
    %v113 = vsel %vm85, %v108, 0.0
    %114 = vadd.xlane.f32.xlu0 %v113
    %v115 = vpop.xlane.xlu0 %114
    %v116 = vsel %vm85, %v109, 0.0
    %117 = vadd.xlane.f32.xlu0 %v116
    %v118 = vpop.xlane.xlu0 %117
    %v119 = vmax.f32 %v112, 1e-24
    %v120 = vmax.f32 %v115, 1e-24
    %v121 = vmax.f32 %v118, 1e-24
    %v122 = vrsqrt.pop %v119
    %v123 = vrsqrt.pop %v120
    %v124 = vrsqrt.pop %v121
    %v125 = vmul.f32 %v104, %v122
    %v126 = vmul.f32 %v105, %v123
    %v127 = vmul.f32 %v106, %v124
    %v128 = vld [vmem:[#allocation8] sm:$0xff]
    %v129 = vld [vmem:[#allocation8 + $0x8] sm:$0xff]
    %v130 = vld [vmem:[#allocation8 + $0x10] sm:$0xff]
    %v131 = vmul.f32 %v128, %v128
    %v132 = vmul.f32 %v129, %v129
    %v133 = vmul.f32 %v130, %v130
    %v134 = vsel %vm85, %v131, 0.0
    %135 = vadd.xlane.f32.xlu0 %v134
    %v136 = vpop.xlane.xlu0 %135
    %v137 = vsel %vm85, %v132, 0.0
    %138 = vadd.xlane.f32.xlu0 %v137
    %v139 = vpop.xlane.xlu0 %138
    %v140 = vsel %vm85, %v133, 0.0
    %141 = vadd.xlane.f32.xlu0 %v140
    %v142 = vpop.xlane.xlu0 %141
    %v143 = vmax.f32 %v136, 1e-24
    %v144 = vmax.f32 %v139, 1e-24
    %v145 = vmax.f32 %v142, 1e-24
    %v146 = vrsqrt.pop %v143
    %v147 = vrsqrt.pop %v144
    %v148 = vrsqrt.pop %v145
    %v149 = vmul.f32 %v128, %v146
    %v150 = vmul.f32 %v129, %v147
    %v151 = vmul.f32 %v130, %v148
    %v152 = vld [vmem:[#allocation9] sm:$0xff]
    %v153 = vld [vmem:[#allocation9 + $0x8] sm:$0xff]
    %v154 = vld [vmem:[#allocation9 + $0x10] sm:$0xff]
    %v155 = vmul.f32 %v152, %v152
    %v156 = vmul.f32 %v153, %v153
    %v157 = vmul.f32 %v154, %v154
    %v158 = vsel %vm85, %v155, 0.0
    %159 = vadd.xlane.f32.xlu0 %v158
    %v160 = vpop.xlane.xlu0 %159
    %v161 = vsel %vm85, %v156, 0.0
    %162 = vadd.xlane.f32.xlu0 %v161
    %v163 = vpop.xlane.xlu0 %162
    %v164 = vsel %vm85, %v157, 0.0
    %165 = vadd.xlane.f32.xlu0 %v164
    %v166 = vpop.xlane.xlu0 %165
    %v167 = vmax.f32 %v160, 1e-24
    %v168 = vmax.f32 %v163, 1e-24
    %v169 = vmax.f32 %v166, 1e-24
    %v170 = vrsqrt.pop %v167
    %v171 = vrsqrt.pop %v168
    %v172 = vrsqrt.pop %v169
    %v173 = vmul.f32 %v152, %v170
    %v174 = vmul.f32 %v153, %v171
    %v175 = vmul.f32 %v154, %v172
    %s176 = smul.u32 0, 24
    %v177 = vlaneseq
    %v178 = vshrl.u32 %v177, 7
    %v179 = vadd.s32 %v178, 8
    %v180 = vadd.s32 %v178, 16
    %v181 = vstv %s176
    %v182 = vadd.s32 %v181, %v178
    %v183 = vadd.s32 %v181, %v179
    %v184 = vadd.s32 %v181, %v180
    %vm185 = vcmp.lt.s32.totalorder %v182, 20
    %vm186 = vcmp.lt.s32.totalorder %v183, 20
    %vm187 = vcmp.lt.s32.totalorder %v184, 20
    %v188 = vsel %vm185, 1, 0
    %v189 = vsel %vm186, 1, 0
    %v190 = vsel %vm187, 1, 0
    %v191 = vcvt.s32.f32 %v188
    %v192 = vcvt.s32.f32 %v189
    %v193 = vcvt.s32.f32 %v190
    %v194 = vadd.f32 %v101, %v125
    %v195 = vadd.f32 %v102, %v126
    %v196 = vadd.f32 %v103, %v127
    %v197 = vsub.f32 %v194, %v149
    %v198 = vsub.f32 %v195, %v150
    %v199 = vsub.f32 %v196, %v151
    %v200 = vmul.f32 %v197, %v197
    %v201 = vmul.f32 %v198, %v198
    %v202 = vmul.f32 %v199, %v199
    %v203 = vsel %vm85, %v200, 0.0
    %204 = vadd.xlane.f32.xlu0 %v203
    %v205 = vpop.xlane.xlu0 %204
    %v206 = vsel %vm85, %v201, 0.0
    %207 = vadd.xlane.f32.xlu0 %v206
    %v208 = vpop.xlane.xlu0 %207
    %v209 = vsel %vm85, %v202, 0.0
    %210 = vadd.xlane.f32.xlu0 %v209
    %v211 = vpop.xlane.xlu0 %210
    %v212 = vsub.f32 %v194, %v173
    %v213 = vsub.f32 %v195, %v174
    %v214 = vsub.f32 %v196, %v175
    %v215 = vmul.f32 %v212, %v212
    %v216 = vmul.f32 %v213, %v213
    %v217 = vmul.f32 %v214, %v214
    %v218 = vsel %vm85, %v215, 0.0
    %219 = vadd.xlane.f32.xlu0 %v218
    %v220 = vpop.xlane.xlu0 %219
    %v221 = vsel %vm85, %v216, 0.0
    %222 = vadd.xlane.f32.xlu0 %v221
    %v223 = vpop.xlane.xlu0 %222
    %v224 = vsel %vm85, %v217, 0.0
    %225 = vadd.xlane.f32.xlu0 %v224
    %v226 = vpop.xlane.xlu0 %225
    %v227 = vsub.f32 %v220, %v205
    %v228 = vsub.f32 %v223, %v208
    %v229 = vsub.f32 %v226, %v211
    %v230 = vmin.f32 %v227, 0.0
    %v231 = vmin.f32 %v228, 0.0
    %v232 = vmin.f32 %v229, 0.0
    %v233 = vand.u32 2147483647, %v227
    %v234 = vand.u32 2147483647, %v228
    %v235 = vand.u32 2147483647, %v229
    %v236 = vsub.f32 0.0, %v233
    %v237 = vsub.f32 0.0, %v234
    %v238 = vsub.f32 0.0, %v235
    %v239 = vmul.f32 %v236, 1.442695
    %v240 = vpow.pop %v239
    %v241 = vmul.f32 %v237, 1.442695
    %v242 = vpow.pop %v241
    %v243 = vmul.f32 %v238, 1.442695
    %v244 = vpow.pop %v243
    %v245 = vadd.f32 %v240, 1.0
    %v246 = vlog2.pop %v245
    %v247 = vmul.f32 %v246, 0.6931472
    %v248 = vmul.f32 -0.5, %v240
    %v249 = vadd.f32 %v248, 1.0
    %v250 = vmul.f32 %v249, %v240
    %v251 = vand.u32 2147483647, %v240
    %vm252 = vcmp.lt.f32.partialorder %v251, 0.0004427343
    %v253 = vsel %vm252, %v250, %v247
    %v254 = vadd.f32 %v242, 1.0
    %v255 = vlog2.pop %v254
    %v256 = vmul.f32 %v255, 0.6931472
    %v257 = vmul.f32 -0.5, %v242
    %v258 = vadd.f32 %v257, 1.0
    %v259 = vmul.f32 %v258, %v242
    %v260 = vand.u32 2147483647, %v242
    %vm261 = vcmp.lt.f32.partialorder %v260, 0.0004427343
    %v262 = vsel %vm261, %v259, %v256
    %v263 = vadd.f32 %v244, 1.0
    %v264 = vlog2.pop %v263
    %v265 = vmul.f32 %v264, 0.6931472
    %v266 = vmul.f32 -0.5, %v244
    %v267 = vadd.f32 %v266, 1.0
    %v268 = vmul.f32 %v267, %v244
    %v269 = vand.u32 2147483647, %v244
    %vm270 = vcmp.lt.f32.partialorder %v269, 0.0004427343
    %v271 = vsel %vm270, %v268, %v265
    %v272 = vsub.f32 %v230, %v253
    %v273 = vsub.f32 %v231, %v262
    %v274 = vsub.f32 %v232, %v271
    %v275 = vsub.f32 0.0, %v272
    %v276 = vsub.f32 0.0, %v273
    %v277 = vsub.f32 0.0, %v274
    %v278 = vmul.f32 %v275, %v191
    %v279 = vmul.f32 %v276, %v192
    %v280 = vmul.f32 %v277, %v193
    %v281 = vadd.f32 %v278, %v279
    %v282 = vadd.f32 %v281, %v280
    %v283 = vrot.slane %v282, 4
    %v284 = vadd.f32 %v282, %v283
    %v285 = vrot.slane %v284, 2
    %v286 = vadd.f32 %v284, %v285
    %v287 = vrot.slane %v286, 1
    %v288 = vadd.f32 %v286, %v287
    %v289 = vmul.f32 %v101, %v101
    %v290 = vmul.f32 %v102, %v102
    %v291 = vmul.f32 %v103, %v103
    %v292 = vsel %vm85, %v289, 0.0
    %293 = vadd.xlane.f32.xlu0 %v292
    %v294 = vpop.xlane.xlu0 %293
    %v295 = vsel %vm85, %v290, 0.0
    %296 = vadd.xlane.f32.xlu0 %v295
    %v297 = vpop.xlane.xlu0 %296
    %v298 = vsel %vm85, %v291, 0.0
    %299 = vadd.xlane.f32.xlu0 %v298
    %v300 = vpop.xlane.xlu0 %299
    %v301 = vmul.f32 %v294, 0.5
    %v302 = vmul.f32 %v297, 0.5
    %v303 = vmul.f32 %v300, 0.5
    %v304 = vadd.f32 %v301, %v302
    %v305 = vadd.f32 %v304, %v303
    %v306 = vrot.slane %v305, 4
    %v307 = vadd.f32 %v305, %v306
    %v308 = vrot.slane %v307, 2
    %v309 = vadd.f32 %v307, %v308
    %v310 = vrot.slane %v309, 1
    %v311 = vadd.f32 %v309, %v310
    %v312 = vmul.f32 %v125, %v125
    %v313 = vmul.f32 %v126, %v126
    %v314 = vmul.f32 %v127, %v127
    %v315 = vsel %vm85, %v312, 0.0
    %316 = vadd.xlane.f32.xlu0 %v315
    %v317 = vpop.xlane.xlu0 %316
    %v318 = vsel %vm85, %v313, 0.0
    %319 = vadd.xlane.f32.xlu0 %v318
    %v320 = vpop.xlane.xlu0 %319
    %v321 = vsel %vm85, %v314, 0.0
    %322 = vadd.xlane.f32.xlu0 %v321
    %v323 = vpop.xlane.xlu0 %322
    %v324 = vmul.f32 %v317, 0.5
    %v325 = vmul.f32 %v320, 0.5
    %v326 = vmul.f32 %v323, 0.5
    %v327 = vadd.f32 %v324, %v325
    %v328 = vadd.f32 %v327, %v326
    %v329 = vrot.slane %v328, 4
    %v330 = vadd.f32 %v328, %v329
    %v331 = vrot.slane %v330, 2
    %v332 = vadd.f32 %v330, %v331
    %v333 = vrot.slane %v332, 1
    %v334 = vadd.f32 %v332, %v333
    %v335 = vadd.f32 %v311, %v334
    %v336 = vmul.f32 %v149, %v149
    %v337 = vmul.f32 %v150, %v150
    %v338 = vmul.f32 %v151, %v151
    %v339 = vsel %vm85, %v336, 0.0
    %340 = vadd.xlane.f32.xlu0 %v339
    %v341 = vpop.xlane.xlu0 %340
    %v342 = vsel %vm85, %v337, 0.0
    %343 = vadd.xlane.f32.xlu0 %v342
    %v344 = vpop.xlane.xlu0 %343
    %v345 = vsel %vm85, %v338, 0.0
    %346 = vadd.xlane.f32.xlu0 %v345
    %v347 = vpop.xlane.xlu0 %346
    %v348 = vmul.f32 %v341, 0.5
    %v349 = vmul.f32 %v344, 0.5
    %v350 = vmul.f32 %v347, 0.5
    %v351 = vadd.f32 %v348, %v349
    %v352 = vadd.f32 %v351, %v350
    %v353 = vrot.slane %v352, 4
    %v354 = vadd.f32 %v352, %v353
    %v355 = vrot.slane %v354, 2
    %v356 = vadd.f32 %v354, %v355
    %v357 = vrot.slane %v356, 1
    %v358 = vadd.f32 %v356, %v357
    %v359 = vadd.f32 %v335, %v358
    %v360 = vmul.f32 %v173, %v173
    %v361 = vmul.f32 %v174, %v174
    %v362 = vmul.f32 %v175, %v175
    %v363 = vsel %vm85, %v360, 0.0
    %364 = vadd.xlane.f32.xlu0 %v363
    %v365 = vpop.xlane.xlu0 %364
    %v366 = vsel %vm85, %v361, 0.0
    %367 = vadd.xlane.f32.xlu0 %v366
    %v368 = vpop.xlane.xlu0 %367
    %v369 = vsel %vm85, %v362, 0.0
    %370 = vadd.xlane.f32.xlu0 %v369
    %v371 = vpop.xlane.xlu0 %370
    %v372 = vmul.f32 %v365, 0.5
    %v373 = vmul.f32 %v368, 0.5
    %v374 = vmul.f32 %v371, 0.5
    %v375 = vadd.f32 %v372, %v373
    %v376 = vadd.f32 %v375, %v374
    %v377 = vrot.slane %v376, 4
    %v378 = vadd.f32 %v376, %v377
    %v379 = vrot.slane %v378, 2
    %v380 = vadd.f32 %v378, %v379
    %v381 = vrot.slane %v380, 1
    %v382 = vadd.f32 %v380, %v381
    %v383 = vadd.f32 %v359, %v382
    %v384 = vld [vmem:[#allocation2] sm:$0x1]
    %v385 = vmul.f32 %v383, 0.0001
    %v386 = vadd.f32 %v288, %v385
    %v387 = vadd.f32 %v384, %v386
    %vm388 = vcmask 0
    %389 = vst.msk [vmem:[#allocation2] sm:$0x1] %vm388, %v387
    // Predicated region
    $region38: #{tpu_custom_call.1} parent=1 // pred_check
      %p390 = pneg %p73
    $region39: #{tpu_custom_call.1} parent=1 // pred_check_branch
      %392 = sbr.rel (%p390) target = $region41
    $region40: #{tpu_custom_call.1} parent=1 // pred_region
      %v393 = vld [vmem:[#allocation2] sm:$0x1]
      %v394 = vmul.f32 %v393, 0.05
      %395 = vst.msk [vmem:[#allocation11] sm:$0x1] %vm388, %v394
    $region41: #{tpu_custom_call.1} parent=1 // pred_fallthru
      _
    // Predicated region
    $region42: #{tpu_custom_call.1} parent=1 // pred_check
      _
    $region43: #{tpu_custom_call.1} parent=1 // pred_check_branch
      %397 = sbr.rel (0) target = $region45
    $region44: #{tpu_custom_call.1} parent=1 // pred_region
      %s399 = ssub.s32 16, 16
      %400 = vsyncadd [#allocation5], %s399
      %s402 = sshll.u32 [#allocation11], 4
      %s403 = int_to_ptr.vmem [resolvable:$true] %s402
      %405 = dma.vmem_to_hbm [thread:$0]  %s403, 16, %s4, [#allocation5]
    $region45: #{tpu_custom_call.1} parent=1 // pred_fallthru
      _
    // Predicated region
    $region46: #{tpu_custom_call.1} parent=1 // pred_check
      _
    $region47: #{tpu_custom_call.1} parent=1 // pred_check_branch
      %407 = sbr.rel (0) target = $region49
    $region48: #{tpu_custom_call.1} parent=1 // pred_region
      %408 = dma.done [#allocation5], 16
    $region49: #{tpu_custom_call.1} parent=1 // pred_fallthru
      _
    %409 = vsyncpa [#allocation4], 1
    %410 = vsyncpa [#allocation7], 1
    %411 = vsyncpa [#allocation10], 1
    %412 = vsyncpa [#allocation5], 1

</llo_original>
